<compile_context>
chip_gen: v7x
topology: tpu7x:2x2x1
jax: 0.10.0
libtpu: 0.0.40
codegen_flags: <defaults>
</compile_context>

<pallas_src>
import math
import jax
import jax.numpy as jnp
from jax import lax
from jax.experimental import pallas as pl
from jax.experimental.pallas import tpu as pltpu


def fixed_embedding_weight(c_in, d_model):
    """Deterministic sinusoidal table, identical to FixedEmbedding.__init__."""
    position = jnp.arange(c_in, dtype=jnp.float32)[:, None]                    # (c_in, 1)
    div_term = jnp.exp(
        jnp.arange(0, d_model, 2, dtype=jnp.float32) * (-(math.log(10000.0) / d_model))
    )                                                                          # (d_model/2,)
    w = jnp.zeros((c_in, d_model), dtype=jnp.float32)
    w = w.at[:, 0::2].set(jnp.sin(position * div_term))
    w = w.at[:, 1::2].set(jnp.cos(position * div_term))
    return w


def _temporal_kernel(idx_ref, table_ref, out_ref):
    """idx_ref: (TILE, NF) int32, already clamped + offset into the merged table.
    table_ref: (128, D_pad) f32 merged table (VMEM-resident).
    out_ref:   (TILE, D_pad) f32."""
    tile = out_ref.shape[0]
    k = table_ref.shape[0]            # 128
    nf = idx_ref.shape[1]

    # One shared iota reused for every feature compare (no per-feature broadcast).
    iota = lax.broadcasted_iota(jnp.int32, (tile, k), 1)

    multihot = (iota == idx_ref[:, 0:1]).astype(jnp.float32)
    for f in range(1, nf):
        multihot = multihot + (iota == idx_ref[:, f:f + 1]).astype(jnp.float32)

    # Single K=128 MXU matmul: multi-hot x merged table == sum of embeddings.
    out_ref[...] = jnp.dot(multihot, table_ref[...],
                           preferred_element_type=jnp.float32)


def _choose_tile_bl(bl, d_pad, nf):
    """Largest BL tile (multiple of 8) keeping double-buffered idx+out blocks
    under ~12 MiB (safe even against v5e's small scoped-VMEM default)."""
    budget = 12 * 1024 * 1024
    per_row = 2 * (d_pad + nf) * 4          # double-buffered out + idx, f32/int32
    t = max(8, min(budget // per_row, 4096))
    t = (t // 8) * 8
    if bl <= t:
        return max(8, ((bl + 7) // 8) * 8)
    return int(t)


def temporal_embedding(x, d_model, freq="h"):
    """x: [B, L, F] integer array (F >= 5 when freq == 't', else F >= 4).
    Returns [B, L, d_model] float32."""
    x = x.astype(jnp.int32)
    B, L, _ = x.shape
    BL = B * L

    # Table sizes exactly as in TemporalEmbedding.__init__.
    minute_size, hour_size, weekday_size, day_size, month_size = 4, 24, 7, 32, 13

    # (feature column, table size) in the order rows are placed in the merged table.
    feats = [(3, hour_size), (2, weekday_size), (1, day_size), (0, month_size)]
    tables = [fixed_embedding_weight(hour_size, d_model),
              fixed_embedding_weight(weekday_size, d_model),
              fixed_embedding_weight(day_size, d_model),
              fixed_embedding_weight(month_size, d_model)]
    if freq == "t":
        feats.append((4, minute_size))
        tables.append(fixed_embedding_weight(minute_size, d_model))

    # Merged table: 76/80 real rows -> pad K to exactly 128; pad columns so the
    # output last dim is a multiple of 128 (lane-dense stores).
    K = 128
    D_pad = max(128, ((d_model + 127) // 128) * 128)
    merged = jnp.concatenate(tables, axis=0)                       # (76 or 80, d_model)
    merged = jnp.pad(merged,
                     ((0, K - merged.shape[0]), (0, D_pad - d_model)))

    # Clamp each feature's index into its own table range, then shift by the
    # feature's row offset in the merged table (clamping prevents aliasing).
    cols = []
    off = 0
    for col, size in feats:
        cols.append(jnp.clip(x[..., col].reshape(BL), 0, size - 1) + off)
        off += size
    idx = jnp.stack(cols, axis=-1).astype(jnp.int32)               # (BL, NF)
    NF = idx.shape[-1]

    # Tile the BL axis; pad to a multiple of the tile (padded rows index row 0,
    # always valid; their outputs are sliced off below).
    TILE = _choose_tile_bl(BL, D_pad, NF)
    BL_pad = ((BL + TILE - 1) // TILE) * TILE
    if BL_pad != BL:
        idx = jnp.pad(idx, ((0, BL_pad - BL), (0, 0)))
    grid = (BL_pad // TILE,)

    out = pl.pallas_call(
        _temporal_kernel,
        out_shape=jax.ShapeDtypeStruct((BL_pad, D_pad), jnp.float32),
        grid_spec=pltpu.PrefetchScalarGridSpec(
            num_scalar_prefetch=0,
            grid=grid,
            in_specs=[
                pl.BlockSpec((TILE, NF), lambda i: (i, 0)),        # streamed idx tiles
                pl.BlockSpec((K, D_pad), lambda i: (0, 0)),        # table: VMEM-resident
            ],
            out_specs=pl.BlockSpec((TILE, D_pad), lambda i: (i, 0)),
        ),
        compiler_params=pltpu.CompilerParams(
            dimension_semantics=("parallel",),                     # megacore on v7x
            vmem_limit_bytes=32 * 1024 * 1024,
        ),
    )(idx, merged)

    return out[:BL, :d_model].reshape(B, L, d_model)


def temporal_embedding_ref(x, d_model, freq="h"):
    """Pure-JAX reference (mirrors the PyTorch forward)."""
    x = x.astype(jnp.int32)
    hour_w = fixed_embedding_weight(24, d_model)
    weekday_w = fixed_embedding_weight(7, d_model)
    day_w = fixed_embedding_weight(32, d_model)
    month_w = fixed_embedding_weight(13, d_model)
    out = (jnp.take(hour_w, x[:, :, 3], axis=0)
           + jnp.take(weekday_w, x[:, :, 2], axis=0)
           + jnp.take(day_w, x[:, :, 1], axis=0)
           + jnp.take(month_w, x[:, :, 0], axis=0))
    if freq == "t":
        minute_w = fixed_embedding_weight(4, d_model)
        out = out + jnp.take(minute_w, x[:, :, 4], axis=0)
    return out


if __name__ == "__main__":
    key = jax.random.PRNGKey(0)
    B, L, d_model = 2, 8, 32
    k0, k1, k2, k3, k4 = jax.random.split(key, 5)
    month = jax.random.randint(k0, (B, L, 1), 0, 13)
    day = jax.random.randint(k1, (B, L, 1), 0, 32)
    weekday = jax.random.randint(k2, (B, L, 1), 0, 7)
    hour = jax.random.randint(k3, (B, L, 1), 0, 24)
    minute = jax.random.randint(k4, (B, L, 1), 0, 4)
    x = jnp.concatenate([month, day, weekday, hour, minute], axis=-1).astype(jnp.int32)

    # default freq='h' (minute embedding contributes 0.0, as in PyTorch)
    out = temporal_embedding(x, d_model, freq="h")
    out = jax.block_until_ready(out)

    ref = temporal_embedding_ref(x, d_model, freq="h")
    assert out.shape == (B, L, d_model)
    assert jnp.allclose(out, ref, atol=1e-5), "mismatch vs reference"

    # also exercise the freq='t' path (includes minute embedding)
    out_t = jax.block_until_ready(temporal_embedding(x, d_model, freq="t"))
    ref_t = temporal_embedding_ref(x, d_model, freq="t")
    assert jnp.allclose(out_t, ref_t, atol=1e-5), "mismatch vs reference (freq='t')"

    print("KERNEL_OK")
</pallas_src>

<mosaic_0001>
module attributes {stable_mosaic.version = 11 : i64} {
  func.func @_temporal_kernel(%arg0: i32, %arg1: memref<16x4xi32, #tpu.memory_space<vmem>>, %arg2: memref<128x128xf32, #tpu.memory_space<vmem>>, %arg3: memref<16x128xf32, #tpu.memory_space<vmem>>) attributes {dimension_semantics = [#tpu.dimension_semantics<parallel>], iteration_bounds = array<i64: 1>, scalar_prefetch = 0 : i64, scratch_operands = 0 : i64, tpu.core_type = #tpu.core_type<tc>, window_params = [{transform_indices = @transform_0, window_bounds = array<i64: 16, 4>}, {pipeline_mode = #tpu.pipeline_mode<synchronous>, transform_indices = @transform_1, window_bounds = array<i64: 128, 128>}, {transform_indices = @transform_2, window_bounds = array<i64: 16, 128>}]} {
    %0 = tpu.iota {dimensions = array<i32: 1>} : vector<16x128xi32>
    %c0 = arith.constant 0 : index
    %c0_0 = arith.constant 0 : index
    %1 = vector.load %arg1[%c0, %c0_0] : memref<16x4xi32, #tpu.memory_space<vmem>>, vector<16x1xi32>
    %2 = vector.broadcast %1 : vector<16x1xi32> to vector<16x128xi32>
    %3 = arith.cmpi eq, %0, %2 : vector<16x128xi32>
    %4 = arith.extui %3 : vector<16x128xi1> to vector<16x128xi32>
    %5 = arith.sitofp %4 : vector<16x128xi32> to vector<16x128xf32>
    %c0_1 = arith.constant 0 : index
    %c1 = arith.constant 1 : index
    %6 = vector.load %arg1[%c0_1, %c1] : memref<16x4xi32, #tpu.memory_space<vmem>>, vector<16x1xi32>
    %7 = vector.broadcast %6 : vector<16x1xi32> to vector<16x128xi32>
    %8 = arith.cmpi eq, %0, %7 : vector<16x128xi32>
    %9 = arith.extui %8 : vector<16x128xi1> to vector<16x128xi32>
    %10 = arith.sitofp %9 : vector<16x128xi32> to vector<16x128xf32>
    %11 = arith.addf %5, %10 : vector<16x128xf32>
    %c0_2 = arith.constant 0 : index
    %c2 = arith.constant 2 : index
    %12 = vector.load %arg1[%c0_2, %c2] : memref<16x4xi32, #tpu.memory_space<vmem>>, vector<16x1xi32>
    %13 = vector.broadcast %12 : vector<16x1xi32> to vector<16x128xi32>
    %14 = arith.cmpi eq, %0, %13 : vector<16x128xi32>
    %15 = arith.extui %14 : vector<16x128xi1> to vector<16x128xi32>
    %16 = arith.sitofp %15 : vector<16x128xi32> to vector<16x128xf32>
    %17 = arith.addf %11, %16 : vector<16x128xf32>
    %c0_3 = arith.constant 0 : index
    %c3 = arith.constant 3 : index
    %18 = vector.load %arg1[%c0_3, %c3] : memref<16x4xi32, #tpu.memory_space<vmem>>, vector<16x1xi32>
    %19 = vector.broadcast %18 : vector<16x1xi32> to vector<16x128xi32>
    %20 = arith.cmpi eq, %0, %19 : vector<16x128xi32>
    %21 = arith.extui %20 : vector<16x128xi1> to vector<16x128xi32>
    %22 = arith.sitofp %21 : vector<16x128xi32> to vector<16x128xf32>
    %23 = arith.addf %17, %22 : vector<16x128xf32>
    %c0_4 = arith.constant 0 : index
    %c0_5 = arith.constant 0 : index
    %24 = vector.load %arg2[%c0_4, %c0_5] : memref<128x128xf32, #tpu.memory_space<vmem>>, vector<128x128xf32>
    %cst = arith.constant dense<0.000000e+00> : vector<16x128xf32>
    %25 = tpu.matmul %23, %24, %cst {dimension_numbers = #tpu.dot_dimension_numbers<[1], [0], [0], [1], [0, 0, 1, 1], [], []>} : vector<16x128xf32>, vector<128x128xf32>, vector<16x128xf32> -> vector<16x128xf32>
    %c0_6 = arith.constant 0 : index
    %c0_7 = arith.constant 0 : index
    %26 = vector.load %arg3[%c0_6, %c0_7] : memref<16x128xf32, #tpu.memory_space<vmem>>, vector<16x128xf32>
    tpu.vector_store %arg3[%c0_6, %c0_7], %25 {strides = array<i32>} : memref<16x128xf32, #tpu.memory_space<vmem>>, vector<16x128xf32>,
    return
  }
  func.func @transform_0(%arg0: i32) -> (i32, i32) {
    %c0_i32 = arith.constant 0 : i32
    %c0_i32_0 = arith.constant 0 : i32
    return %arg0, %c0_i32 : i32, i32
  }
  func.func @transform_1(%arg0: i32) -> (i32, i32) {
    %c0_i32 = arith.constant 0 : i32
    %c0_i32_0 = arith.constant 0 : i32
    %c0_i32_1 = arith.constant 0 : i32
    return %c0_i32, %c0_i32_0 : i32, i32
  }
  func.func @transform_2(%arg0: i32) -> (i32, i32) {
    %c0_i32 = arith.constant 0 : i32
    %c0_i32_0 = arith.constant 0 : i32
    return %arg0, %c0_i32 : i32, i32
  }
}

</mosaic_0001>

<llo_original>
// kernel: tpu_custom_call.1
$region0: #{tpu_custom_call.1}
  #allocation0 [shape = 'u32[]', space=smem, size = 0x4, offset = 0x4, fixed_abs, tag = 'smem constant byte address 0x4 - core index']
  #allocation1 [shape = 'u32[144,128]{1,0:T(1,128)}', space=vmem, size = 0x12000, scoped, tag = 'internal scratch']
  %s0 = inlined_call_operand.vmem [shape: s32[16,4], index: 0, kind: input, shape index: {}]
  %s1 = inlined_call_operand.hbm [shape: f32[128,128], index: 1, kind: input, shape index: {}]
  %s2 = inlined_call_operand.hbm [shape: f32[16,128], index: 2, kind: output, shape index: {}]
  %s3 = sld [smem:[#allocation0]]
  $region22: #{tpu_custom_call.1} parent=0
    _
  %s5 = ssub.s32 1, %s3
  %s6 = scalar_select 0, %s5, %s3
  $region1: #{tpu_custom_call.1} parent=0
    #allocation2 [shape = 'u8[65536]{0}', space=vmem, size = 0x10000, scoped, tag = 'input window, operand 1, single buffered']
    #allocation3 [shape = 's32[1]{0}', space=sflag, size = 0x4, scoped, tag = 'scoped memory for tpu_custom_call.1']
    #allocation4 [shape = 's32[1]{0}', space=sflag, size = 0x4, scoped, tag = 'scoped memory for tpu_custom_call.1']
    #allocation5 [shape = 'u8[8192]{0}', space=vmem, size = 0x2000, scoped, tag = 'output window, operand 0, single buffered']
    %7 = vsyncpa [#allocation3], 0
    %8 = vsyncpa [#allocation4], 0
    // Predicated region
    $region2: #{tpu_custom_call.1} parent=1 // pred_check
      _
    $region3: #{tpu_custom_call.1} parent=1 // pred_check_branch
      %10 = sbr.rel (0) target = $region5
    $region4: #{tpu_custom_call.1} parent=1 // pred_region
      _
    $region5: #{tpu_custom_call.1} parent=1 // pred_fallthru
      _
    // Predicated region
    $region6: #{tpu_custom_call.1} parent=1 // pred_check
      _
    $region7: #{tpu_custom_call.1} parent=1 // pred_check_branch
      %12 = sbr.rel (0) target = $region9
    $region8: #{tpu_custom_call.1} parent=1 // pred_region
      %s14 = ssub.s32 2048, 2048
      %15 = vsyncadd [#allocation3], %s14
      %s16 = sshll.u32 [#allocation2], 4
      %s17 = int_to_ptr.vmem [resolvable:$true] %s16
      %22 = dma.hbm_to_vmem [thread:$0]  %s1, 2048, %s17, [#allocation3], 128, 128, 8
    $region9: #{tpu_custom_call.1} parent=1 // pred_fallthru
      _
    // Predicated region
    $region10: #{tpu_custom_call.1} parent=1 // pred_check
      _
    $region11: #{tpu_custom_call.1} parent=1 // pred_check_branch
      %24 = sbr.rel (0) target = $region13
    $region12: #{tpu_custom_call.1} parent=1 // pred_region
      %25 = dma.done [#allocation3], 2048
    $region13: #{tpu_custom_call.1} parent=1 // pred_fallthru
      _
    %v26 = vlaneseq
    %v27 = vand.u32 %v26, 127
    %v28 = vld [vmem:[%s0] sm:$0xff]
    %v29 = vld [vmem:[%s0 + $0x8] sm:$0xff]
    %30 = vset.pattern.permute.xlu0 0
    %31 = vperm.xlu0 %30, %v28
    %v32 = vpop.permute.xlu0 %31
    %33 = vset.pattern.permute.xlu0 0
    %34 = vperm.xlu0 %33, %v29
    %v35 = vpop.permute.xlu0 %34
    %vm36 = vcmp.eq.s32.totalorder %v27, %v32
    %vm37 = vcmp.eq.s32.totalorder %v27, %v35
    %v38 = vsel %vm36, 1, 0
    %v39 = vsel %vm37, 1, 0
    %v40 = vcvt.s32.f32 %v38
    %v41 = vcvt.s32.f32 %v39
    %42 = vset.pattern.permute.xlu0 1
    %43 = vperm.xlu0 %42, %v28
    %v44 = vpop.permute.xlu0 %43
    %45 = vset.pattern.permute.xlu0 1
    %46 = vperm.xlu0 %45, %v29
    %v47 = vpop.permute.xlu0 %46
    %vm48 = vcmp.eq.s32.totalorder %v27, %v44
    %vm49 = vcmp.eq.s32.totalorder %v27, %v47
    %v50 = vsel %vm48, 1, 0
    %v51 = vsel %vm49, 1, 0
    %v52 = vcvt.s32.f32 %v50
    %v53 = vcvt.s32.f32 %v51
    %v54 = vadd.f32 %v40, %v52
    %v55 = vadd.f32 %v41, %v53
    %56 = vset.pattern.permute.xlu0 2
    %57 = vperm.xlu0 %56, %v28
    %v58 = vpop.permute.xlu0 %57
    %59 = vset.pattern.permute.xlu0 2
    %60 = vperm.xlu0 %59, %v29
    %v61 = vpop.permute.xlu0 %60
    %vm62 = vcmp.eq.s32.totalorder %v27, %v58
    %vm63 = vcmp.eq.s32.totalorder %v27, %v61
    %v64 = vsel %vm62, 1, 0
    %v65 = vsel %vm63, 1, 0
    %v66 = vcvt.s32.f32 %v64
    %v67 = vcvt.s32.f32 %v65
    %v68 = vadd.f32 %v54, %v66
    %v69 = vadd.f32 %v55, %v67
    %70 = vset.pattern.permute.xlu0 3
    %71 = vperm.xlu0 %70, %v28
    %v72 = vpop.permute.xlu0 %71
    %73 = vset.pattern.permute.xlu0 3
    %74 = vperm.xlu0 %73, %v29
    %v75 = vpop.permute.xlu0 %74
    %vm76 = vcmp.eq.s32.totalorder %v27, %v72
    %vm77 = vcmp.eq.s32.totalorder %v27, %v75
    %v78 = vsel %vm76, 1, 0
    %v79 = vsel %vm77, 1, 0
    %v80 = vcvt.s32.f32 %v78
    %v81 = vcvt.s32.f32 %v79
    %v82 = vadd.f32 %v68, %v80
    %v83 = vadd.f32 %v69, %v81
    %v84 = vld [vmem:[#allocation2] sm:$0xff]
    %v85 = vld [vmem:[#allocation2 + $0x8] sm:$0xff]
    %v86 = vld [vmem:[#allocation2 + $0x10] sm:$0xff]
    %v87 = vld [vmem:[#allocation2 + $0x18] sm:$0xff]
    %v88 = vld [vmem:[#allocation2 + $0x20] sm:$0xff]
    %v89 = vld [vmem:[#allocation2 + $0x28] sm:$0xff]
    %v90 = vld [vmem:[#allocation2 + $0x30] sm:$0xff]
    %v91 = vld [vmem:[#allocation2 + $0x38] sm:$0xff]
    %v92 = vld [vmem:[#allocation2 + $0x40] sm:$0xff]
    %v93 = vld [vmem:[#allocation2 + $0x48] sm:$0xff]
    %v94 = vld [vmem:[#allocation2 + $0x50] sm:$0xff]
    %v95 = vld [vmem:[#allocation2 + $0x58] sm:$0xff]
    %v96 = vld [vmem:[#allocation2 + $0x60] sm:$0xff]
    %v97 = vld [vmem:[#allocation2 + $0x68] sm:$0xff]
    %v98 = vld [vmem:[#allocation2 + $0x70] sm:$0xff]
    %v99 = vld [vmem:[#allocation2 + $0x78] sm:$0xff]
    %100 = vmatprep.subr.mxu0 0.0
    %101 = vmatpush1.msra.mxu0 %v84
    %102 = vmatprep.subr.mxu0 0.0
    %103 = vmatpush1.msra.mxu0 %v85
    %104 = vmatprep.subr.mxu0 0.0
    %105 = vmatpush1.msra.mxu0 %v86
    %106 = vmatprep.subr.mxu0 0.0
    %107 = vmatpush1.msra.mxu0 %v87
    %108 = vmatprep.subr.mxu0 0.0
    %109 = vmatpush1.msra.mxu0 %v88
    %110 = vmatprep.subr.mxu0 0.0
    %111 = vmatpush1.msra.mxu0 %v89
    %112 = vmatprep.subr.mxu0 0.0
    %113 = vmatpush1.msra.mxu0 %v90
    %114 = vmatprep.subr.mxu0 0.0
    %115 = vmatpush1.msra.mxu0 %v91
    %116 = vmatprep.subr.mxu0 0.0
    %117 = vmatpush1.msra.mxu0 %v92
    %118 = vmatprep.subr.mxu0 0.0
    %119 = vmatpush1.msra.mxu0 %v93
    %120 = vmatprep.subr.mxu0 0.0
    %121 = vmatpush1.msra.mxu0 %v94
    %122 = vmatprep.subr.mxu0 0.0
    %123 = vmatpush1.msra.mxu0 %v95
    %124 = vmatprep.subr.mxu0 0.0
    %125 = vmatpush1.msra.mxu0 %v96
    %126 = vmatprep.subr.mxu0 0.0
    %127 = vmatpush1.msra.mxu0 %v97
    %128 = vmatprep.subr.mxu0 0.0
    %129 = vmatpush1.msra.mxu0 %v98
    %130 = vmatprep.subr.mxu0 0.0
    %131 = vmatpush1.msra.mxu0 %v99
    %132 = vmatprep.subr.mxu0 0.0
    %133 = vmatpush1.msra.mxu0 0.0
    %134 = vmatprep.subr.mxu0 0.0
    %135 = vmatpush1.msra.mxu0 0.0
    %136 = vmatprep.subr.mxu0 0.0
    %137 = vmatpush1.msra.mxu0 0.0
    %138 = vmatprep.subr.mxu0 0.0
    %139 = vmatpush1.msra.mxu0 0.0
    %140 = vmatprep.subr.mxu0 0.0
    %141 = vmatpush1.msra.mxu0 0.0
    %142 = vmatprep.subr.mxu0 0.0
    %143 = vmatpush1.msra.mxu0 0.0
    %144 = vmatprep.subr.mxu0 0.0
    %145 = vmatpush1.msra.mxu0 0.0
    %146 = vmatprep.subr.mxu0 0.0
    %147 = vmatpush1.msra.mxu0 0.0
    %148 = vmatprep.subr.mxu0 0.0
    %149 = vmatpush1.msra.mxu0 0.0
    %150 = vmatprep.subr.mxu0 0.0
    %151 = vmatpush1.msra.mxu0 0.0
    %152 = vmatprep.subr.mxu0 0.0
    %153 = vmatpush1.msra.mxu0 0.0
    %154 = vmatprep.subr.mxu0 0.0
    %155 = vmatpush1.msra.mxu0 0.0
    %156 = vmatprep.subr.mxu0 0.0
    %157 = vmatpush1.msra.mxu0 0.0
    %158 = vmatprep.subr.mxu0 0.0
    %159 = vmatpush1.msra.mxu0 0.0
    %160 = vmatprep.subr.mxu0 0.0
    %161 = vmatpush1.msra.mxu0 0.0
    %162 = vmatprep.subr.mxu0 0.0
    %163 = vmatpush1.msra.mxu0 0.0
    %164 = vmatprep.mubr.f32.mxu0 0.0
    %165 = vmatmul.mubr.f32.gmra.mrb[0].mxu0 %v82
    %v166 = vpop.f32.mrb[0].mxu0
    %v167 = vadd.f32 0.0, %v166
    %v168 = vpop.f32.mrb[0].mxu0
    %169 = vmatprep.mubr.f32.mxu0 0.0
    %170 = vmatmul.mubr.f32.gmra.mrb[0].mxu0 %v83
    %v171 = vpop.f32.mrb[0].mxu0
    %v172 = vadd.f32 0.0, %v171
    %v173 = vpop.f32.mrb[0].mxu0
    %174 = vdwg.mxu0
    %175 = vst [vmem:[#allocation5] sm:$0xff] %v167
    %176 = vst [vmem:[#allocation5 + $0x8] sm:$0xff] %v172
    // Predicated region
    $region14: #{tpu_custom_call.1} parent=1 // pred_check
      _
    $region15: #{tpu_custom_call.1} parent=1 // pred_check_branch
      %178 = sbr.rel (0) target = $region17
    $region16: #{tpu_custom_call.1} parent=1 // pred_region
      %s180 = ssub.s32 256, 256
      %181 = vsyncadd [#allocation4], %s180
      %s182 = sshll.u32 [#allocation5], 4
      %s183 = int_to_ptr.vmem [resolvable:$true] %s182
      %188 = dma.vmem_to_hbm [thread:$0]  %s183, 256, %s2, [#allocation4], 128, 128, 8
    $region17: #{tpu_custom_call.1} parent=1 // pred_fallthru
      _
    // Predicated region
    $region18: #{tpu_custom_call.1} parent=1 // pred_check
      _
    $region19: #{tpu_custom_call.1} parent=1 // pred_check_branch
      %190 = sbr.rel (0) target = $region21
    $region20: #{tpu_custom_call.1} parent=1 // pred_region
      %191 = dma.done [#allocation4], 256
    $region21: #{tpu_custom_call.1} parent=1 // pred_fallthru
      _
    %192 = vsyncpa [#allocation3], 1
    %193 = vsyncpa [#allocation4], 1

</llo_original>
